<compile_context>
chip_gen: v7x
topology: tpu7x:2x2x1
jax: 0.10.0
libtpu: 0.0.40
codegen_flags: <defaults>
</compile_context>

<pallas_src>
import math

import jax
import jax.numpy as jnp
from jax.experimental import pallas as pl
from jax.experimental.pallas import tpu as pltpu

_MIB = 1024 * 1024


# ---------------------------------------------------------------------------
# Generation-aware sizing
# ---------------------------------------------------------------------------
def _vmem_capacity_bytes():
    try:
        info = pltpu.get_tpu_info()
        cap = getattr(info, "vmem_capacity_bytes", None)
        if cap:
            return int(cap)
    except Exception:
        pass
    return 128 * _MIB  # v5e/v6e default


def _generation_budgets():
    """VMEM budget, scoped-limit, per-step DMA target and tile caps."""
    phys = _vmem_capacity_bytes()
    if phys <= 64 * _MIB:
        # v7x-class: 64 MiB VMEM, ~3.2 TB/s HBM, 2 TensorCores.
        budget = 44 * _MIB
        vmem_limit = 48 * _MIB
        target_step = 6 * _MIB
        tb_cap, tk_cap, tn_cap = 512, 1024, 512
    else:
        # v5e/v6e: 128 MiB VMEM.
        budget = 96 * _MIB
        vmem_limit = 100 * _MIB
        target_step = 3 * _MIB
        tb_cap, tk_cap, tn_cap = 512, 2048, 512
    return phys, budget, vmem_limit, target_step, (tb_cap, tk_cap, tn_cap)


def _pick_tile(dim, cap, aligns):
    """Largest divisor of `dim` <= cap that is a multiple of one of `aligns`
    (tried in preference order), else the full dim (always a legal block)."""
    if dim <= cap:
        return dim
    for a in aligns:
        t = (cap // a) * a
        while t >= a:
            if dim % t == 0:
                return t
            t -= a
    return dim


def _block_bytes(g, tb, tk, tn, in_isz, out_isz, use_scratch, in_bufs=2):
    x_b = g * tb * tk * in_isz
    w_b = g * tk * tn * in_isz
    b_b = g * tn * 4
    o_b = g * tb * tn * out_isz
    total = in_bufs * (x_b + w_b + b_b) + 2 * o_b
    if use_scratch:
        total += g * tb * tn * 4  # resident f32 accumulator
    return total


def _step_bytes(g, tb, tk, tn, in_isz, out_isz):
    return g * ((tb * tk + tk * tn + tn) * in_isz + tb * tn * out_isz)


# ---------------------------------------------------------------------------
# Kernels
# ---------------------------------------------------------------------------
def _mm_kernel_fused(x_ref, w_ref, b_ref, o_ref):
    """f32-output path: accumulate directly into the resident output block
    (its block index is K-invariant), no scratch, bias folded in at k==0."""
    k = pl.program_id(3)
    part = jnp.einsum("gbk,gkn->gbn", x_ref[...], w_ref[...],
                      preferred_element_type=jnp.float32)

    @pl.when(k == 0)
    def _():
        o_ref[...] = part + b_ref[...]

    @pl.when(k > 0)
    def _():
        o_ref[...] += part


def _mm_kernel_acc(x_ref, w_ref, b_ref, o_ref, acc_ref):
    """Low-precision-output path: f32 scratch accumulator, cast at k==last."""
    k = pl.program_id(3)
    part = jnp.einsum("gbk,gkn->gbn", x_ref[...], w_ref[...],
                      preferred_element_type=jnp.float32)

    @pl.when(k == 0)
    def _():
        acc_ref[...] = part

    @pl.when(k > 0)
    def _():
        acc_ref[...] += part

    @pl.when(k == pl.num_programs(3) - 1)
    def _():
        o_ref[...] = (acc_ref[...]
                      + b_ref[...].astype(jnp.float32)).astype(o_ref.dtype)


# ---------------------------------------------------------------------------
# Pallas driver
# ---------------------------------------------------------------------------
def _run_grouped(x, weights, bias, out_dtype):
    """x: (M, B, K), weights: (M, K, N), bias: (M, 1, N) -> (M, B, N)."""
    n_models, batch, size_in = x.shape
    size_out = weights.shape[-1]
    in_isz = jnp.dtype(x.dtype).itemsize
    out_isz = jnp.dtype(out_dtype).itemsize
    use_scratch = out_dtype != jnp.float32

    phys, budget, vmem_limit, target_step, caps = _generation_budgets()
    tb_cap, tk_cap, tn_cap = caps

    tb = _pick_tile(batch, tb_cap, (8,))
    tk = _pick_tile(size_in, tk_cap, (256, 128))   # prefer 256-wide for MXU
    tn = _pick_tile(size_out, tn_cap, (256, 128))

    b_tiles = batch // tb
    n_tiles = size_out // tn
    k_tiles = size_in // tk

    # v7x megacore: keep at least one "parallel" grid axis with extent >= 2
    # when possible (neutral on single-TC v5e/v6e).
    if b_tiles * n_tiles >= 2 or n_models == 1:
        max_g = n_models
    else:
        max_g = max(1, n_models // 2)

    g = 1
    for cand in range(1, max_g + 1):
        if n_models % cand:
            continue
        if _block_bytes(cand, tb, tk, tn, in_isz, out_isz, use_scratch) > budget:
            break
        g = cand
        if _step_bytes(cand, tb, tk, tn, in_isz, out_isz) >= target_step:
            break

    # Deeper pipelining when the K reduction has many tiles and it still fits.
    deep = (k_tiles >= 4 and
            _block_bytes(g, tb, tk, tn, in_isz, out_isz, use_scratch,
                         in_bufs=3) <= budget)
    in_mode = dict(pipeline_mode=pl.Buffered(3)) if deep else {}

    needed = _block_bytes(g, tb, tk, tn, in_isz, out_isz, use_scratch,
                          in_bufs=3 if deep else 2)
    # Raise the scoped VMEM limit; never exceed physical (awkward full-dim
    # fallbacks get as much room as the chip has).
    vmem_limit = int(min(phys - 2 * _MIB, max(vmem_limit, needed + 8 * _MIB)))

    grid = (n_models // g, b_tiles, n_tiles, k_tiles)

    in_specs = [
        pl.BlockSpec((g, tb, tk), lambda m, b, n, k: (m, b, k), **in_mode),
        # Weight block index is independent of the batch-tile axis.
        pl.BlockSpec((g, tk, tn), lambda m, b, n, k: (m, k, n), **in_mode),
        pl.BlockSpec((g, 1, tn), lambda m, b, n, k: (m, 0, n)),
    ]
    # Output block index is independent of K -> block stays resident.
    out_specs = pl.BlockSpec((g, tb, tn), lambda m, b, n, k: (m, b, n))

    if use_scratch:
        kernel = _mm_kernel_acc
        scratch_shapes = [pltpu.VMEM((g, tb, tn), jnp.float32)]
    else:
        kernel = _mm_kernel_fused
        scratch_shapes = []

    grid_spec = pltpu.PrefetchScalarGridSpec(
        num_scalar_prefetch=0,
        grid=grid,
        in_specs=in_specs,
        out_specs=out_specs,
        scratch_shapes=scratch_shapes,
    )

    return pl.pallas_call(
        kernel,
        out_shape=jax.ShapeDtypeStruct((n_models, batch, size_out), out_dtype),
        grid_spec=grid_spec,
        compiler_params=pltpu.CompilerParams(
            dimension_semantics=("parallel", "parallel", "parallel",
                                 "arbitrary"),
            vmem_limit_bytes=vmem_limit),
    )(x, weights, bias)


def multi_linear_forward(x, weights, bias, *, compute_dtype=None):
    """x: (n_models, B, size_in) -> (n_models, B, size_out).

    compute_dtype: optionally cast x/weights (e.g. jnp.bfloat16) before the
    matmul; accumulation stays f32.  Halves HBM traffic / VMEM, bf16-native
    MXU on v6e/v7x.
    """
    n_models, batch, size_in = x.shape
    size_out = weights.shape[-1]
    out_dtype = jnp.result_type(x.dtype, weights.dtype, bias.dtype)

    if compute_dtype is not None:
        x = x.astype(compute_dtype)
        weights = weights.astype(compute_dtype)

    # ---- Small-model fast path: block-diagonal, lane-dense packing. ----
    # With size_out (or size_in) below the 128-lane width, the per-model
    # output stores would be masked vst.msk partial stores and the MXU would
    # run sub-128 matmuls.  Pack all models block-diagonally into ONE
    # lane-dense matmul instead (wrapper-side layout plumbing only).
    small = (size_out < 128 or size_in < 128)
    if n_models > 1 and small and n_models * max(size_in, size_out) <= 1024:
        pk = n_models * size_in
        pn = n_models * size_out
        x_p = jnp.transpose(x, (1, 0, 2)).reshape(batch, pk)[None]     # (1,B,M*K)
        eye = jnp.eye(n_models, dtype=weights.dtype)
        w_bd = (weights[:, :, None, :] * eye[:, None, :, None]).reshape(pk, pn)
        b_p = bias.reshape(1, 1, pn)
        out_p = _run_grouped(x_p, w_bd[None], b_p, out_dtype)          # (1,B,M*N)
        return out_p[0].reshape(batch, n_models, size_out).transpose(1, 0, 2)

    return _run_grouped(x, weights, bias, out_dtype)


# ---------------------------------------------------------------------------
# Init + reference
# ---------------------------------------------------------------------------
def init_params(key, n_models, size_in, size_out, dtype=jnp.float32):
    """Deterministic init mirroring nn.init.kaiming_uniform_(a=sqrt(5)).

    NOTE: PyTorch's fan_in for a 3-D (n_models, size_in, size_out) tensor is
    size(1) * receptive_field = size_in * size_out (NOT the usual size_in).
    This deliberately mirrors that quirk -- do not "fix" it.
    """
    a = math.sqrt(5.0)
    gain = math.sqrt(2.0 / (1.0 + a * a))
    fan_in = size_in * size_out
    bound = gain * math.sqrt(3.0 / fan_in)
    weights = jax.random.uniform(
        key, (n_models, size_in, size_out), dtype=dtype,
        minval=-bound, maxval=bound)
    bias = jnp.zeros((n_models, 1, size_out), dtype=dtype)
    return weights, bias


def _reference(x, weights, bias):
    n_models = x.shape[0]
    size_out = weights.shape[-1]
    wx = jnp.einsum("mbk,mkn->mbn", x, weights,
                    precision=jax.lax.Precision.HIGHEST)
    return wx.reshape(n_models, -1, size_out) + bias


if __name__ == "__main__":
    key = jax.random.PRNGKey(0)
    k1, k2, k3, k4, k5, k6 = jax.random.split(key, 6)

    # --- Case 1: tiny module-like shapes -> block-diagonal lane-dense path. ---
    n_models, batch, size_in, size_out = 4, 8, 32, 16
    weights, bias = init_params(k1, n_models, size_in, size_out)
    x = jax.random.normal(k2, (n_models, batch, size_in), dtype=jnp.float32)

    out = jax.block_until_ready(multi_linear_forward(x, weights, bias))
    ref = _reference(x, weights, bias)
    assert out.shape == (n_models, batch, size_out)
    assert jnp.allclose(out, ref, atol=1e-5, rtol=1e-5)

    # --- Case 2: larger shapes -> main tiled path, f32 accumulate-in-output. ---
    n_models, batch, size_in, size_out = 2, 512, 1024, 256
    weights2, bias2 = init_params(k3, n_models, size_in, size_out)
    x2 = jax.random.normal(k4, (n_models, batch, size_in), dtype=jnp.float32)

    out2 = jax.block_until_ready(multi_linear_forward(x2, weights2, bias2))
    ref2 = _reference(x2, weights2, bias2)
    assert out2.shape == (n_models, batch, size_out)
    assert jnp.allclose(out2, ref2, atol=1e-4, rtol=1e-4)

    # --- Case 2b: optional bf16-compute path (f32 accumulation / output). ---
    out2b = jax.block_until_ready(
        multi_linear_forward(x2, weights2, bias2, compute_dtype=jnp.bfloat16))
    assert jnp.allclose(out2b, ref2, atol=2e-2, rtol=2e-2)

    # --- Case 3: bf16 params/activations/output -> scratch-accumulator path. ---
    n_models, batch, size_in, size_out = 2, 16, 256, 128
    w3, b3 = init_params(k5, n_models, size_in, size_out, dtype=jnp.bfloat16)
    x3 = jax.random.normal(k6, (n_models, batch, size_in), dtype=jnp.bfloat16)

    out3 = jax.block_until_ready(multi_linear_forward(x3, w3, b3))
    ref3 = _reference(x3.astype(jnp.float32), w3.astype(jnp.float32),
                      b3.astype(jnp.float32))
    assert out3.shape == (n_models, batch, size_out)
    assert jnp.allclose(out3.astype(jnp.float32), ref3, atol=2e-2, rtol=2e-2)

    print("KERNEL_OK")
</pallas_src>

<mosaic_0001>
module attributes {stable_mosaic.version = 11 : i64} {
  func.func @_mm_kernel_fused(%arg0: i32, %arg1: i32, %arg2: i32, %arg3: i32, %arg4: memref<1x8x128xf32, #tpu.memory_space<vmem>>, %arg5: memref<1x128x64xf32, #tpu.memory_space<vmem>>, %arg6: memref<1x1x64xf32, #tpu.memory_space<vmem>>, %arg7: memref<1x8x64xf32, #tpu.memory_space<vmem>>) attributes {dimension_semantics = [#tpu.dimension_semantics<parallel>, #tpu.dimension_semantics<parallel>, #tpu.dimension_semantics<parallel>, #tpu.dimension_semantics<arbitrary>], iteration_bounds = array<i64: 1, 1, 1, 1>, scalar_prefetch = 0 : i64, scratch_operands = 0 : i64, tpu.core_type = #tpu.core_type<tc>, window_params = [{transform_indices = @transform_0, window_bounds = array<i64: 1, 8, 128>}, {transform_indices = @transform_1, window_bounds = array<i64: 1, 128, 64>}, {transform_indices = @transform_2, window_bounds = array<i64: 1, 1, 64>}, {transform_indices = @transform_3, window_bounds = array<i64: 1, 8, 64>}]} {
    %c0 = arith.constant 0 : index
    %c0_0 = arith.constant 0 : index
    %c0_1 = arith.constant 0 : index
    %0 = vector.load %arg4[%c0, %c0_0, %c0_1] : memref<1x8x128xf32, #tpu.memory_space<vmem>>, vector<1x8x128xf32>
    %c0_2 = arith.constant 0 : index
    %c0_3 = arith.constant 0 : index
    %c0_4 = arith.constant 0 : index
    %1 = vector.load %arg5[%c0_2, %c0_3, %c0_4] : memref<1x128x64xf32, #tpu.memory_space<vmem>>, vector<1x128x64xf32>
    "tpu.trace_start"() <{level = 10 : i32, message = "gbk,gkn->gbn"}> : () -> ()
    %cst = arith.constant dense<0.000000e+00> : vector<1x8x64xf32>
    %2 = tpu.matmul %0, %1, %cst {dimension_numbers = #tpu.dot_dimension_numbers<[2], [1], [1], [2], [0, 0, 0, 1, 1, 2], [0], [0]>} : vector<1x8x128xf32>, vector<1x128x64xf32>, vector<1x8x64xf32> -> vector<1x8x64xf32>
    %c0_i32 = arith.constant 0 : i32
    "tpu.trace_stop"() : () -> ()
    %3 = arith.cmpi eq, %arg3, %c0_i32 : i32
    %4 = arith.extui %3 : i1 to i32
    %c0_i32_5 = arith.constant 0 : i32
    %5 = arith.cmpi ne, %4, %c0_i32_5 : i32
    scf.if %5 {
      %c0_8 = arith.constant 0 : index
      %c0_9 = arith.constant 0 : index
      %c0_10 = arith.constant 0 : index
      %9 = vector.load %arg6[%c0_8, %c0_9, %c0_10] : memref<1x1x64xf32, #tpu.memory_space<vmem>>, vector<1x1x64xf32>
      %10 = vector.broadcast %9 : vector<1x1x64xf32> to vector<1x8x64xf32>
      %11 = arith.addf %2, %10 : vector<1x8x64xf32>
      %c0_11 = arith.constant 0 : index
      %c0_12 = arith.constant 0 : index
      %c0_13 = arith.constant 0 : index
      %12 = vector.load %arg7[%c0_11, %c0_12, %c0_13] : memref<1x8x64xf32, #tpu.memory_space<vmem>>, vector<1x8x64xf32>
      tpu.vector_store %arg7[%c0_11, %c0_12, %c0_13], %11 {strides = array<i32>} : memref<1x8x64xf32, #tpu.memory_space<vmem>>, vector<1x8x64xf32>,
    } else {
    }
    %c0_i32_6 = arith.constant 0 : i32
    %6 = arith.cmpi sgt, %arg3, %c0_i32_6 : i32
    %7 = arith.extui %6 : i1 to i32
    %c0_i32_7 = arith.constant 0 : i32
    %8 = arith.cmpi ne, %7, %c0_i32_7 : i32
    scf.if %8 {
      %c0_8 = arith.constant 0 : index
      %c0_9 = arith.constant 0 : index
      %c0_10 = arith.constant 0 : index
      %9 = vector.load %arg7[%c0_8, %c0_9, %c0_10] : memref<1x8x64xf32, #tpu.memory_space<vmem>>, vector<1x8x64xf32>
      %10 = arith.addf %9, %2 : vector<1x8x64xf32>
      %c0_11 = arith.constant 0 : index
      %c0_12 = arith.constant 0 : index
      %c0_13 = arith.constant 0 : index
      %11 = vector.load %arg7[%c0_11, %c0_12, %c0_13] : memref<1x8x64xf32, #tpu.memory_space<vmem>>, vector<1x8x64xf32>
      tpu.vector_store %arg7[%c0_11, %c0_12, %c0_13], %10 {strides = array<i32>} : memref<1x8x64xf32, #tpu.memory_space<vmem>>, vector<1x8x64xf32>,
    } else {
    }
    return
  }
  func.func @transform_0(%arg0: i32, %arg1: i32, %arg2: i32, %arg3: i32) -> (i32, i32, i32) {
    %c0_i32 = arith.constant 0 : i32
    return %arg0, %arg1, %arg3 : i32, i32, i32
  }
  func.func @transform_1(%arg0: i32, %arg1: i32, %arg2: i32, %arg3: i32) -> (i32, i32, i32) {
    %c0_i32 = arith.constant 0 : i32
    return %arg0, %arg3, %arg2 : i32, i32, i32
  }
  func.func @transform_2(%arg0: i32, %arg1: i32, %arg2: i32, %arg3: i32) -> (i32, i32, i32) {
    %c0_i32 = arith.constant 0 : i32
    %c0_i32_0 = arith.constant 0 : i32
    return %arg0, %c0_i32, %arg2 : i32, i32, i32
  }
  func.func @transform_3(%arg0: i32, %arg1: i32, %arg2: i32, %arg3: i32) -> (i32, i32, i32) {
    %c0_i32 = arith.constant 0 : i32
    return %arg0, %arg1, %arg2 : i32, i32, i32
  }
}

</mosaic_0001>

<llo_original>
// kernel: tpu_custom_call.1
$region0: #{tpu_custom_call.1}
  #allocation0 [shape = 'u32[]', space=smem, size = 0x4, offset = 0x4, fixed_abs, tag = 'smem constant byte address 0x4 - core index']
  #allocation1 [shape = 'u32[144,128]{1,0:T(1,128)}', space=vmem, size = 0x12000, scoped, tag = 'internal scratch']
  %s0 = inlined_call_operand.hbm [shape: f32[1,8,128], index: 0, kind: input, shape index: {}]
  %s1 = inlined_call_operand.hbm [shape: f32[1,128,64], index: 1, kind: input, shape index: {}]
  %s2 = inlined_call_operand.hbm [shape: f32[1,1,64], index: 2, kind: input, shape index: {}]
  %s3 = inlined_call_operand.hbm [shape: f32[1,8,64], index: 3, kind: output, shape index: {}]
  %s4 = sld [smem:[#allocation0]]
  $region42: #{tpu_custom_call.1} parent=0
    _
  %s6 = ssub.s32 1, %s4
  %s7 = scalar_select 0, %s6, %s4
  $region1: #{tpu_custom_call.1} parent=0
    #allocation2 [shape = 'u8[4096]{0}', space=vmem, size = 0x1000, scoped, tag = 'input window, operand 0, single buffered']
    #allocation3 [shape = 's32[1]{0}', space=sflag, size = 0x4, scoped, tag = 'scoped memory for tpu_custom_call.1']
    #allocation4 [shape = 's32[1]{0}', space=sflag, size = 0x4, scoped, tag = 'scoped memory for tpu_custom_call.1']
    #allocation5 [shape = 'u8[65536]{0}', space=vmem, size = 0x10000, scoped, tag = 'input window, operand 1, single buffered']
    #allocation6 [shape = 's32[1]{0}', space=sflag, size = 0x4, scoped, tag = 'scoped memory for tpu_custom_call.1']
    #allocation7 [shape = 'u8[512]{0}', space=vmem, size = 0x400, scoped, tag = 'input window, operand 2, single buffered']
    #allocation8 [shape = 'u8[4096]{0}', space=vmem, size = 0x1000, scoped, tag = 'output window, operand 0, single buffered']
    %8 = vsyncpa [#allocation3], 0
    %9 = vsyncpa [#allocation6], 0
    %10 = vsyncpa [#allocation4], 0
    // Predicated region
    $region2: #{tpu_custom_call.1} parent=1 // pred_check
      _
    $region3: #{tpu_custom_call.1} parent=1 // pred_check_branch
      %12 = sbr.rel (0) target = $region5
    $region4: #{tpu_custom_call.1} parent=1 // pred_region
      %s14 = ssub.s32 128, 128
      %15 = vsyncadd [#allocation3], %s14
      %s17 = sshll.u32 [#allocation2], 4
      %s18 = int_to_ptr.vmem [resolvable:$true] %s17
      %20 = dma.hbm_to_vmem [thread:$0]  %s0, 128, %s18, [#allocation3]
    $region5: #{tpu_custom_call.1} parent=1 // pred_fallthru
      _
    // Predicated region
    $region6: #{tpu_custom_call.1} parent=1 // pred_check
      _
    $region7: #{tpu_custom_call.1} parent=1 // pred_check_branch
      %22 = sbr.rel (0) target = $region9
    $region8: #{tpu_custom_call.1} parent=1 // pred_region
      %s24 = ssub.s32 2048, 2048
      %25 = vsyncadd [#allocation6], %s24
      %s26 = sshll.u32 [#allocation5], 4
      %s27 = int_to_ptr.vmem [resolvable:$true] %s26
      %32 = dma.hbm_to_vmem [thread:$0]  %s1, 2048, %s27, [#allocation6], 128, 128, 8
    $region9: #{tpu_custom_call.1} parent=1 // pred_fallthru
      _
    // Predicated region
    $region10: #{tpu_custom_call.1} parent=1 // pred_check
      _
    $region11: #{tpu_custom_call.1} parent=1 // pred_check_branch
      %34 = sbr.rel (0) target = $region13
    $region12: #{tpu_custom_call.1} parent=1 // pred_region
      %s36 = ssub.s32 16, 16
      %37 = vsyncadd [#allocation6], %s36
      %s39 = sshll.u32 [#allocation7], 4
      %s40 = int_to_ptr.vmem [resolvable:$true] %s39
      %42 = dma.hbm_to_vmem [thread:$0]  %s2, 16, %s40, [#allocation6]
    $region13: #{tpu_custom_call.1} parent=1 // pred_fallthru
      _
    // Predicated region
    $region14: #{tpu_custom_call.1} parent=1 // pred_check
      _
    $region15: #{tpu_custom_call.1} parent=1 // pred_check_branch
      %44 = sbr.rel (0) target = $region17
    $region16: #{tpu_custom_call.1} parent=1 // pred_region
      %45 = dma.done [#allocation3], 128
    $region17: #{tpu_custom_call.1} parent=1 // pred_fallthru
      _
    // Predicated region
    $region18: #{tpu_custom_call.1} parent=1 // pred_check
      _
    $region19: #{tpu_custom_call.1} parent=1 // pred_check_branch
      %47 = sbr.rel (0) target = $region21
    $region20: #{tpu_custom_call.1} parent=1 // pred_region
      %48 = dma.done [#allocation6], 2048
    $region21: #{tpu_custom_call.1} parent=1 // pred_fallthru
      _
    // Predicated region
    $region22: #{tpu_custom_call.1} parent=1 // pred_check
      _
    $region23: #{tpu_custom_call.1} parent=1 // pred_check_branch
      %50 = sbr.rel (0) target = $region25
    $region24: #{tpu_custom_call.1} parent=1 // pred_region
      %51 = dma.done [#allocation6], 16
    $region25: #{tpu_custom_call.1} parent=1 // pred_fallthru
      _
    %v52 = vld [vmem:[#allocation2] sm:$0xff]
    %v53 = vld [vmem:[#allocation5] sm:$0xff]
    %v54 = vld [vmem:[#allocation5 + $0x8] sm:$0xff]
    %v55 = vld [vmem:[#allocation5 + $0x10] sm:$0xff]
    %v56 = vld [vmem:[#allocation5 + $0x18] sm:$0xff]
    %v57 = vld [vmem:[#allocation5 + $0x20] sm:$0xff]
    %v58 = vld [vmem:[#allocation5 + $0x28] sm:$0xff]
    %v59 = vld [vmem:[#allocation5 + $0x30] sm:$0xff]
    %v60 = vld [vmem:[#allocation5 + $0x38] sm:$0xff]
    %v61 = vld [vmem:[#allocation5 + $0x40] sm:$0xff]
    %v62 = vld [vmem:[#allocation5 + $0x48] sm:$0xff]
    %v63 = vld [vmem:[#allocation5 + $0x50] sm:$0xff]
    %v64 = vld [vmem:[#allocation5 + $0x58] sm:$0xff]
    %v65 = vld [vmem:[#allocation5 + $0x60] sm:$0xff]
    %v66 = vld [vmem:[#allocation5 + $0x68] sm:$0xff]
    %v67 = vld [vmem:[#allocation5 + $0x70] sm:$0xff]
    %v68 = vld [vmem:[#allocation5 + $0x78] sm:$0xff]
    %69 = vmatprep.subr.mxu0 0.0
    %70 = vmatpush1.msra.mxu0 %v53
    %71 = vmatprep.subr.mxu0 0.0
    %72 = vmatpush1.msra.mxu0 %v54
    %73 = vmatprep.subr.mxu0 0.0
    %74 = vmatpush1.msra.mxu0 %v55
    %75 = vmatprep.subr.mxu0 0.0
    %76 = vmatpush1.msra.mxu0 %v56
    %77 = vmatprep.subr.mxu0 0.0
    %78 = vmatpush1.msra.mxu0 %v57
    %79 = vmatprep.subr.mxu0 0.0
    %80 = vmatpush1.msra.mxu0 %v58
    %81 = vmatprep.subr.mxu0 0.0
    %82 = vmatpush1.msra.mxu0 %v59
    %83 = vmatprep.subr.mxu0 0.0
    %84 = vmatpush1.msra.mxu0 %v60
    %85 = vmatprep.subr.mxu0 0.0
    %86 = vmatpush1.msra.mxu0 %v61
    %87 = vmatprep.subr.mxu0 0.0
    %88 = vmatpush1.msra.mxu0 %v62
    %89 = vmatprep.subr.mxu0 0.0
    %90 = vmatpush1.msra.mxu0 %v63
    %91 = vmatprep.subr.mxu0 0.0
    %92 = vmatpush1.msra.mxu0 %v64
    %93 = vmatprep.subr.mxu0 0.0
    %94 = vmatpush1.msra.mxu0 %v65
    %95 = vmatprep.subr.mxu0 0.0
    %96 = vmatpush1.msra.mxu0 %v66
    %97 = vmatprep.subr.mxu0 0.0
    %98 = vmatpush1.msra.mxu0 %v67
    %99 = vmatprep.subr.mxu0 0.0
    %100 = vmatpush1.msra.mxu0 %v68
    %101 = vmatprep.subr.mxu0 0.0
    %102 = vmatpush1.msra.mxu0 0.0
    %103 = vmatprep.subr.mxu0 0.0
    %104 = vmatpush1.msra.mxu0 0.0
    %105 = vmatprep.subr.mxu0 0.0
    %106 = vmatpush1.msra.mxu0 0.0
    %107 = vmatprep.subr.mxu0 0.0
    %108 = vmatpush1.msra.mxu0 0.0
    %109 = vmatprep.subr.mxu0 0.0
    %110 = vmatpush1.msra.mxu0 0.0
    %111 = vmatprep.subr.mxu0 0.0
    %112 = vmatpush1.msra.mxu0 0.0
    %113 = vmatprep.subr.mxu0 0.0
    %114 = vmatpush1.msra.mxu0 0.0
    %115 = vmatprep.subr.mxu0 0.0
    %116 = vmatpush1.msra.mxu0 0.0
    %117 = vmatprep.subr.mxu0 0.0
    %118 = vmatpush1.msra.mxu0 0.0
    %119 = vmatprep.subr.mxu0 0.0
    %120 = vmatpush1.msra.mxu0 0.0
    %121 = vmatprep.subr.mxu0 0.0
    %122 = vmatpush1.msra.mxu0 0.0
    %123 = vmatprep.subr.mxu0 0.0
    %124 = vmatpush1.msra.mxu0 0.0
    %125 = vmatprep.subr.mxu0 0.0
    %126 = vmatpush1.msra.mxu0 0.0
    %127 = vmatprep.subr.mxu0 0.0
    %128 = vmatpush1.msra.mxu0 0.0
    %129 = vmatprep.subr.mxu0 0.0
    %130 = vmatpush1.msra.mxu0 0.0
    %131 = vmatprep.subr.mxu0 0.0
    %132 = vmatpush1.msra.mxu0 0.0
    %133 = vmatprep.mubr.f32.mxu0 0.0
    %134 = vmatmul.mubr.f32.gmra.mrb[0].mxu0 %v52
    %v135 = vpop.f32.mrb[0].mxu0
    %v136 = vadd.f32 0.0, %v135
    %v137 = vpop.f32.mrb[0].mxu0
    %138 = vdwg.mxu0
    %p139 = scmp.eq.s32.totalorder 0, 0
    // Predicated region
    $region26: #{tpu_custom_call.1} parent=1 // pred_check
      %p140 = pneg %p139
    $region27: #{tpu_custom_call.1} parent=1 // pred_check_branch
      %142 = sbr.rel (%p140) target = $region29
    $region28: #{tpu_custom_call.1} parent=1 // pred_region
      %v143 = vld [vmem:[#allocation7] sm:$0x1]
      %v145 = vlaneseq
      %v146 = vshrl.u32 %v145, 7
      %v147 = vsub.s32 0, %v146
      %v148 = vrot.slane %v143, %v147
      %v150 = vadd.f32 %v136, %v148
      %vm151 = vcmask 523264
      %152 = vst.msk [vmem:[#allocation8] sm:$0xff] %vm151, %v150
    $region29: #{tpu_custom_call.1} parent=1 // pred_fallthru
      _
    %p153 = scmp.gt.s32.totalorder 0, 0
    // Predicated region
    $region30: #{tpu_custom_call.1} parent=1 // pred_check
      %p154 = pneg %p153
    $region31: #{tpu_custom_call.1} parent=1 // pred_check_branch
      %156 = sbr.rel (%p154) target = $region33
    $region32: #{tpu_custom_call.1} parent=1 // pred_region
      %v157 = vld [vmem:[#allocation8] sm:$0xff]
      %v158 = vadd.f32 %v157, %v136
      %vm159 = vcmask 523264
      %160 = vst.msk [vmem:[#allocation8] sm:$0xff] %vm159, %v158
    $region33: #{tpu_custom_call.1} parent=1 // pred_fallthru
      _
    // Predicated region
    $region34: #{tpu_custom_call.1} parent=1 // pred_check
      _
    $region35: #{tpu_custom_call.1} parent=1 // pred_check_branch
      %162 = sbr.rel (0) target = $region37
    $region36: #{tpu_custom_call.1} parent=1 // pred_region
      %s164 = ssub.s32 128, 128
      %165 = vsyncadd [#allocation4], %s164
      %s167 = sshll.u32 [#allocation8], 4
      %s168 = int_to_ptr.vmem [resolvable:$true] %s167
      %170 = dma.vmem_to_hbm [thread:$0]  %s168, 128, %s3, [#allocation4]
    $region37: #{tpu_custom_call.1} parent=1 // pred_fallthru
      _
    // Predicated region
    $region38: #{tpu_custom_call.1} parent=1 // pred_check
      _
    $region39: #{tpu_custom_call.1} parent=1 // pred_check_branch
      %172 = sbr.rel (0) target = $region41
    $region40: #{tpu_custom_call.1} parent=1 // pred_region
      %173 = dma.done [#allocation4], 128
    $region41: #{tpu_custom_call.1} parent=1 // pred_fallthru
      _
    %174 = vsyncpa [#allocation3], 1
    %175 = vsyncpa [#allocation6], 1
    %176 = vsyncpa [#allocation4], 1

</llo_original>
